<compile_context>
chip_gen: v5e
topology: v5e:2x2
jax: 0.10.0
libtpu: 0.0.40
codegen_flags: <defaults>
</compile_context>

<pallas_src>
import jax
import jax.numpy as jnp
from jax.experimental import pallas as pl
from jax.experimental.pallas import tpu as pltpu


def _make_dma_copy_kernel(chunks):
    """Build a kernel that copies `chunks` (static (row_start, row_size) pairs)
    of a 3-D slab from the input HBM ref to the output HBM ref via async DMA."""

    def kernel(x_hbm, o_hbm, sems):
        copies = []
        # Issue every DMA first (multiple descriptors in flight), then wait.
        for i, (start, size) in enumerate(chunks):
            cp = pltpu.make_async_copy(
                x_hbm.at[pl.ds(start, size)],
                o_hbm.at[pl.ds(start, size)],
                sems.at[i],
            )
            cp.start()
            copies.append(cp)
        for cp in copies:
            cp.wait()

    return kernel


def variable_splitter(x, *, max_chunks=4):
    """rearrange(x, 'b f p n -> (b f) p n'); the copy is a raw HBM->HBM DMA."""
    B, F, P, N = x.shape
    rows = B * F
    out_shape3d = (rows, P, N)
    num_elems = rows * P * N

    if num_elems == 0:
        # Nothing to copy; the reshape itself is metadata-only.
        return jnp.reshape(x, out_shape3d)

    # Metadata-only view to the output layout (contiguous, same bytes).
    x3 = jnp.reshape(x, out_shape3d)

    # Split the leading dim into <=max_chunks roughly-equal contiguous chunks
    # so several DMA descriptors can be in flight simultaneously.
    num_chunks = max(1, min(max_chunks, rows))
    base, rem = divmod(rows, num_chunks)
    chunks = []
    start = 0
    for i in range(num_chunks):
        size = base + (1 if i < rem else 0)
        chunks.append((start, size))
        start += size

    itemsize = jnp.dtype(x.dtype).itemsize

    out = pl.pallas_call(
        _make_dma_copy_kernel(chunks),
        out_shape=jax.ShapeDtypeStruct(out_shape3d, x.dtype),
        in_specs=[pl.BlockSpec(memory_space=pl.ANY)],
        out_specs=pl.BlockSpec(memory_space=pl.ANY),
        scratch_shapes=[pltpu.SemaphoreType.DMA((num_chunks,))],
        cost_estimate=pl.CostEstimate(
            flops=0,
            transcendentals=0,
            bytes_accessed=2 * num_elems * itemsize,
        ),
    )(x3)

    return out


if __name__ == "__main__":
    key = jax.random.PRNGKey(0)

    # Shape implied by the module's forward: (batch, features, p, n).
    B, F, P, N = 2, 4, 16, 16
    x = jax.random.normal(key, (B, F, P, N), dtype=jnp.float32)

    out = jax.block_until_ready(variable_splitter(x))
    ref = x.reshape(B * F, P, N)
    assert out.shape == (B * F, P, N)
    assert out.dtype == x.dtype
    assert jnp.array_equal(out, ref)

    # Awkward (non-tile-aligned) shape — the DMA path has no (8,128) constraint.
    x2 = jax.random.normal(jax.random.PRNGKey(1), (2, 3, 7, 5), dtype=jnp.float32)
    out2 = jax.block_until_ready(variable_splitter(x2))
    assert jnp.array_equal(out2, x2.reshape(6, 7, 5))

    # bf16 input and multi-chunk copy (rows=12 -> 4 chunks in flight).
    x3 = jax.random.normal(jax.random.PRNGKey(2), (3, 4, 64, 128)).astype(jnp.bfloat16)
    out3 = jax.block_until_ready(variable_splitter(x3))
    assert out3.dtype == jnp.bfloat16
    assert jnp.array_equal(out3, x3.reshape(12, 64, 128))

    print("KERNEL_OK")
</pallas_src>

<mosaic_0001>
module attributes {stable_mosaic.version = 11 : i64} {
  func.func @kernel(%arg0: memref<8x16x16xf32, #tpu.memory_space<any>>, %arg1: memref<8x16x16xf32, #tpu.memory_space<any>>, %arg2: memref<4x!tpu.dma_semaphore, #tpu.memory_space<semaphore_mem>>) attributes {dimension_semantics = [], scalar_prefetch = 0 : i64, scratch_operands = 1 : i64, tpu.core_type = #tpu.core_type<tc>} {
    %c0_i32 = arith.constant 0 : i32
    %c0_i32_0 = arith.constant 0 : i32
    %c0_i32_1 = arith.constant 0 : i32
    %c0_i32_2 = arith.constant 0 : i32
    %0 = tpu.memref_slice %arg0[%c0_i32_0, %c0_i32_1, %c0_i32_2] : memref<8x16x16xf32, #tpu.memory_space<any>> -> memref<2x16x16xf32, #tpu.memory_space<any>>
    %c0_i32_3 = arith.constant 0 : i32
    %c0_i32_4 = arith.constant 0 : i32
    %c0_i32_5 = arith.constant 0 : i32
    %1 = tpu.memref_slice %arg1[%c0_i32_3, %c0_i32_4, %c0_i32_5] : memref<8x16x16xf32, #tpu.memory_space<any>> -> memref<2x16x16xf32, #tpu.memory_space<any>>
    %2 = tpu.memref_slice %arg2[%c0_i32] : memref<4x!tpu.dma_semaphore, #tpu.memory_space<semaphore_mem>> -> memref<1x!tpu.dma_semaphore, #tpu.memory_space<semaphore_mem>>
    %3 = tpu.memref_squeeze %2 : memref<1x!tpu.dma_semaphore, #tpu.memory_space<semaphore_mem>> -> memref<!tpu.dma_semaphore, #tpu.memory_space<semaphore_mem>>
    tpu.enqueue_dma source(%0 : memref<2x16x16xf32, #tpu.memory_space<any>>) target(%1 : memref<2x16x16xf32, #tpu.memory_space<any>>) target_semaphore(%3 : memref<!tpu.dma_semaphore, #tpu.memory_space<semaphore_mem>>)
    %c1_i32 = arith.constant 1 : i32
    %c2_i32 = arith.constant 2 : i32
    %c0_i32_6 = arith.constant 0 : i32
    %c0_i32_7 = arith.constant 0 : i32
    %4 = tpu.memref_slice %arg0[%c2_i32, %c0_i32_6, %c0_i32_7] : memref<8x16x16xf32, #tpu.memory_space<any>> -> memref<2x16x16xf32, #tpu.memory_space<any>>
    %c2_i32_8 = arith.constant 2 : i32
    %c0_i32_9 = arith.constant 0 : i32
    %c0_i32_10 = arith.constant 0 : i32
    %5 = tpu.memref_slice %arg1[%c2_i32_8, %c0_i32_9, %c0_i32_10] : memref<8x16x16xf32, #tpu.memory_space<any>> -> memref<2x16x16xf32, #tpu.memory_space<any>>
    %6 = tpu.memref_slice %arg2[%c1_i32] : memref<4x!tpu.dma_semaphore, #tpu.memory_space<semaphore_mem>> -> memref<1x!tpu.dma_semaphore, #tpu.memory_space<semaphore_mem>>
    %7 = tpu.memref_squeeze %6 : memref<1x!tpu.dma_semaphore, #tpu.memory_space<semaphore_mem>> -> memref<!tpu.dma_semaphore, #tpu.memory_space<semaphore_mem>>
    tpu.enqueue_dma source(%4 : memref<2x16x16xf32, #tpu.memory_space<any>>) target(%5 : memref<2x16x16xf32, #tpu.memory_space<any>>) target_semaphore(%7 : memref<!tpu.dma_semaphore, #tpu.memory_space<semaphore_mem>>)
    %c2_i32_11 = arith.constant 2 : i32
    %c4_i32 = arith.constant 4 : i32
    %c0_i32_12 = arith.constant 0 : i32
    %c0_i32_13 = arith.constant 0 : i32
    %8 = tpu.memref_slice %arg0[%c4_i32, %c0_i32_12, %c0_i32_13] : memref<8x16x16xf32, #tpu.memory_space<any>> -> memref<2x16x16xf32, #tpu.memory_space<any>>
    %c4_i32_14 = arith.constant 4 : i32
    %c0_i32_15 = arith.constant 0 : i32
    %c0_i32_16 = arith.constant 0 : i32
    %9 = tpu.memref_slice %arg1[%c4_i32_14, %c0_i32_15, %c0_i32_16] : memref<8x16x16xf32, #tpu.memory_space<any>> -> memref<2x16x16xf32, #tpu.memory_space<any>>
    %10 = tpu.memref_slice %arg2[%c2_i32_11] : memref<4x!tpu.dma_semaphore, #tpu.memory_space<semaphore_mem>> -> memref<1x!tpu.dma_semaphore, #tpu.memory_space<semaphore_mem>>
    %11 = tpu.memref_squeeze %10 : memref<1x!tpu.dma_semaphore, #tpu.memory_space<semaphore_mem>> -> memref<!tpu.dma_semaphore, #tpu.memory_space<semaphore_mem>>
    tpu.enqueue_dma source(%8 : memref<2x16x16xf32, #tpu.memory_space<any>>) target(%9 : memref<2x16x16xf32, #tpu.memory_space<any>>) target_semaphore(%11 : memref<!tpu.dma_semaphore, #tpu.memory_space<semaphore_mem>>)
    %c3_i32 = arith.constant 3 : i32
    %c6_i32 = arith.constant 6 : i32
    %c0_i32_17 = arith.constant 0 : i32
    %c0_i32_18 = arith.constant 0 : i32
    %12 = tpu.memref_slice %arg0[%c6_i32, %c0_i32_17, %c0_i32_18] : memref<8x16x16xf32, #tpu.memory_space<any>> -> memref<2x16x16xf32, #tpu.memory_space<any>>
    %c6_i32_19 = arith.constant 6 : i32
    %c0_i32_20 = arith.constant 0 : i32
    %c0_i32_21 = arith.constant 0 : i32
    %13 = tpu.memref_slice %arg1[%c6_i32_19, %c0_i32_20, %c0_i32_21] : memref<8x16x16xf32, #tpu.memory_space<any>> -> memref<2x16x16xf32, #tpu.memory_space<any>>
    %14 = tpu.memref_slice %arg2[%c3_i32] : memref<4x!tpu.dma_semaphore, #tpu.memory_space<semaphore_mem>> -> memref<1x!tpu.dma_semaphore, #tpu.memory_space<semaphore_mem>>
    %15 = tpu.memref_squeeze %14 : memref<1x!tpu.dma_semaphore, #tpu.memory_space<semaphore_mem>> -> memref<!tpu.dma_semaphore, #tpu.memory_space<semaphore_mem>>
    tpu.enqueue_dma source(%12 : memref<2x16x16xf32, #tpu.memory_space<any>>) target(%13 : memref<2x16x16xf32, #tpu.memory_space<any>>) target_semaphore(%15 : memref<!tpu.dma_semaphore, #tpu.memory_space<semaphore_mem>>)
    %c0_i32_22 = arith.constant 0 : i32
    %c0_i32_23 = arith.constant 0 : i32
    %c0_i32_24 = arith.constant 0 : i32
    %c0_i32_25 = arith.constant 0 : i32
    %16 = tpu.memref_slice %arg0[%c0_i32_23, %c0_i32_24, %c0_i32_25] : memref<8x16x16xf32, #tpu.memory_space<any>> -> memref<2x16x16xf32, #tpu.memory_space<any>>
    %c0_i32_26 = arith.constant 0 : i32
    %c0_i32_27 = arith.constant 0 : i32
    %c0_i32_28 = arith.constant 0 : i32
    %17 = tpu.memref_slice %arg1[%c0_i32_26, %c0_i32_27, %c0_i32_28] : memref<8x16x16xf32, #tpu.memory_space<any>> -> memref<2x16x16xf32, #tpu.memory_space<any>>
    %18 = tpu.memref_slice %arg2[%c0_i32_22] : memref<4x!tpu.dma_semaphore, #tpu.memory_space<semaphore_mem>> -> memref<1x!tpu.dma_semaphore, #tpu.memory_space<semaphore_mem>>
    %19 = tpu.memref_squeeze %18 : memref<1x!tpu.dma_semaphore, #tpu.memory_space<semaphore_mem>> -> memref<!tpu.dma_semaphore, #tpu.memory_space<semaphore_mem>>
    tpu.wait_dma2 semaphore(%19 : memref<!tpu.dma_semaphore, #tpu.memory_space<semaphore_mem>>) src(%16 : memref<2x16x16xf32, #tpu.memory_space<any>>) dst(%17 : memref<2x16x16xf32, #tpu.memory_space<any>>)
    %c1_i32_29 = arith.constant 1 : i32
    %c2_i32_30 = arith.constant 2 : i32
    %c0_i32_31 = arith.constant 0 : i32
    %c0_i32_32 = arith.constant 0 : i32
    %20 = tpu.memref_slice %arg0[%c2_i32_30, %c0_i32_31, %c0_i32_32] : memref<8x16x16xf32, #tpu.memory_space<any>> -> memref<2x16x16xf32, #tpu.memory_space<any>>
    %c2_i32_33 = arith.constant 2 : i32
    %c0_i32_34 = arith.constant 0 : i32
    %c0_i32_35 = arith.constant 0 : i32
    %21 = tpu.memref_slice %arg1[%c2_i32_33, %c0_i32_34, %c0_i32_35] : memref<8x16x16xf32, #tpu.memory_space<any>> -> memref<2x16x16xf32, #tpu.memory_space<any>>
    %22 = tpu.memref_slice %arg2[%c1_i32_29] : memref<4x!tpu.dma_semaphore, #tpu.memory_space<semaphore_mem>> -> memref<1x!tpu.dma_semaphore, #tpu.memory_space<semaphore_mem>>
    %23 = tpu.memref_squeeze %22 : memref<1x!tpu.dma_semaphore, #tpu.memory_space<semaphore_mem>> -> memref<!tpu.dma_semaphore, #tpu.memory_space<semaphore_mem>>
    tpu.wait_dma2 semaphore(%23 : memref<!tpu.dma_semaphore, #tpu.memory_space<semaphore_mem>>) src(%20 : memref<2x16x16xf32, #tpu.memory_space<any>>) dst(%21 : memref<2x16x16xf32, #tpu.memory_space<any>>)
    %c2_i32_36 = arith.constant 2 : i32
    %c4_i32_37 = arith.constant 4 : i32
    %c0_i32_38 = arith.constant 0 : i32
    %c0_i32_39 = arith.constant 0 : i32
    %24 = tpu.memref_slice %arg0[%c4_i32_37, %c0_i32_38, %c0_i32_39] : memref<8x16x16xf32, #tpu.memory_space<any>> -> memref<2x16x16xf32, #tpu.memory_space<any>>
    %c4_i32_40 = arith.constant 4 : i32
    %c0_i32_41 = arith.constant 0 : i32
    %c0_i32_42 = arith.constant 0 : i32
    %25 = tpu.memref_slice %arg1[%c4_i32_40, %c0_i32_41, %c0_i32_42] : memref<8x16x16xf32, #tpu.memory_space<any>> -> memref<2x16x16xf32, #tpu.memory_space<any>>
    %26 = tpu.memref_slice %arg2[%c2_i32_36] : memref<4x!tpu.dma_semaphore, #tpu.memory_space<semaphore_mem>> -> memref<1x!tpu.dma_semaphore, #tpu.memory_space<semaphore_mem>>
    %27 = tpu.memref_squeeze %26 : memref<1x!tpu.dma_semaphore, #tpu.memory_space<semaphore_mem>> -> memref<!tpu.dma_semaphore, #tpu.memory_space<semaphore_mem>>
    tpu.wait_dma2 semaphore(%27 : memref<!tpu.dma_semaphore, #tpu.memory_space<semaphore_mem>>) src(%24 : memref<2x16x16xf32, #tpu.memory_space<any>>) dst(%25 : memref<2x16x16xf32, #tpu.memory_space<any>>)
    %c3_i32_43 = arith.constant 3 : i32
    %c6_i32_44 = arith.constant 6 : i32
    %c0_i32_45 = arith.constant 0 : i32
    %c0_i32_46 = arith.constant 0 : i32
    %28 = tpu.memref_slice %arg0[%c6_i32_44, %c0_i32_45, %c0_i32_46] : memref<8x16x16xf32, #tpu.memory_space<any>> -> memref<2x16x16xf32, #tpu.memory_space<any>>
    %c6_i32_47 = arith.constant 6 : i32
    %c0_i32_48 = arith.constant 0 : i32
    %c0_i32_49 = arith.constant 0 : i32
    %29 = tpu.memref_slice %arg1[%c6_i32_47, %c0_i32_48, %c0_i32_49] : memref<8x16x16xf32, #tpu.memory_space<any>> -> memref<2x16x16xf32, #tpu.memory_space<any>>
    %30 = tpu.memref_slice %arg2[%c3_i32_43] : memref<4x!tpu.dma_semaphore, #tpu.memory_space<semaphore_mem>> -> memref<1x!tpu.dma_semaphore, #tpu.memory_space<semaphore_mem>>
    %31 = tpu.memref_squeeze %30 : memref<1x!tpu.dma_semaphore, #tpu.memory_space<semaphore_mem>> -> memref<!tpu.dma_semaphore, #tpu.memory_space<semaphore_mem>>
    tpu.wait_dma2 semaphore(%31 : memref<!tpu.dma_semaphore, #tpu.memory_space<semaphore_mem>>) src(%28 : memref<2x16x16xf32, #tpu.memory_space<any>>) dst(%29 : memref<2x16x16xf32, #tpu.memory_space<any>>)
    return
  }
}

</mosaic_0001>

<llo_original>
// kernel: tpu_custom_call.1
$region0: #{tpu_custom_call.1}
  #allocation0 [shape = 'u32[]', space=smem, size = 0x4, offset = 0x4, fixed_abs, tag = 'smem constant byte address 0x4 - core index']
  #allocation1 [shape = 'u32[72,128]{1,0:T(1,128)}', space=vmem, size = 0x9000, scoped, tag = 'internal scratch']
  #allocation2 [shape = 's32[4]{0}', space=sflag, size = 0x10, scoped, tag = 'scratch operand']
  #allocation3 [shape = 's32[]', space=sflag, size = 0x4, offset = 0, fixed_abs, tag = 'sflag constant byte address 0x0 - dummy sync flag']
  #allocation4 [shape = 'u32[0]{0}', space=smem, size = 0, offset = 0, fixed_abs, tag = 'smem constant byte address 0x0 - null']
  #allocation5 [shape = 's32[]', space=sflag, size = 0x4, offset = 0, fixed_abs, tag = 'sflag constant byte address 0x0 - dummy sync flag']
  #allocation6 [shape = 'u32[0]{0}', space=smem, size = 0, offset = 0, fixed_abs, tag = 'smem constant byte address 0x0 - null']
  #allocation7 [shape = 's32[]', space=sflag, size = 0x4, offset = 0, fixed_abs, tag = 'sflag constant byte address 0x0 - dummy sync flag']
  #allocation8 [shape = 'u32[0]{0}', space=smem, size = 0, offset = 0, fixed_abs, tag = 'smem constant byte address 0x0 - null']
  #allocation9 [shape = 's32[]', space=sflag, size = 0x4, offset = 0, fixed_abs, tag = 'sflag constant byte address 0x0 - dummy sync flag']
  #allocation10 [shape = 'u32[0]{0}', space=smem, size = 0, offset = 0, fixed_abs, tag = 'smem constant byte address 0x0 - null']
  %s0 = inlined_call_operand.hbm [shape: f32[8,16,16], index: 0, kind: input, shape index: {}]
  %s1 = inlined_call_operand.hbm [shape: f32[8,16,16], index: 1, kind: output, shape index: {}]
  %s2 = sld [smem:[#allocation0]]
  $region2: #{tpu_custom_call.1} parent=0
    _
  %s4 = ssub.s32 1, %s2
  %s5 = scalar_select 0, %s4, %s2
  %s7 = sshll.u32 1, 14
  %s8 = sxor.u32 4294967295, %s7
  %s10 = sshll.u32 %s0, 4
  %s11 = int_to_ptr.hbm [resolvable:$true] %s10
  %s12 = sshll.u32 %s1, 4
  %s13 = int_to_ptr.hbm [resolvable:$true] %s12
  %16 = dma.general %s11, 512, %s13, [#allocation2], [#allocation3], [#allocation4], 0, 0
  %s17 = scalar_lea.hbm %s0, 32
  %s18 = scalar_lea.hbm %s1, 32
  %s19 = scalar_lea.sflag [#allocation2], 1
  %s21 = sshll.u32 1, 14
  %s22 = sxor.u32 4294967295, %s21
  %s24 = sshll.u32 %s17, 4
  %s25 = int_to_ptr.hbm [resolvable:$true] %s24
  %s26 = sshll.u32 %s18, 4
  %s27 = int_to_ptr.hbm [resolvable:$true] %s26
  %30 = dma.general %s25, 512, %s27, %s19, [#allocation5], [#allocation6], 0, 0
  %s31 = scalar_lea.hbm %s0, 64
  %s32 = scalar_lea.hbm %s1, 64
  %s33 = scalar_lea.sflag [#allocation2], 2
  %s35 = sshll.u32 1, 14
  %s36 = sxor.u32 4294967295, %s35
  %s38 = sshll.u32 %s31, 4
  %s39 = int_to_ptr.hbm [resolvable:$true] %s38
  %s40 = sshll.u32 %s32, 4
  %s41 = int_to_ptr.hbm [resolvable:$true] %s40
  %44 = dma.general %s39, 512, %s41, %s33, [#allocation7], [#allocation8], 0, 0
  %s45 = scalar_lea.hbm %s0, 96
  %s46 = scalar_lea.hbm %s1, 96
  %s47 = scalar_lea.sflag [#allocation2], 3
  %s49 = sshll.u32 1, 14
  %s50 = sxor.u32 4294967295, %s49
  %s52 = sshll.u32 %s45, 4
  %s53 = int_to_ptr.hbm [resolvable:$true] %s52
  %s54 = sshll.u32 %s46, 4
  %s55 = int_to_ptr.hbm [resolvable:$true] %s54
  %58 = dma.general %s53, 512, %s55, %s47, [#allocation9], [#allocation10], 0, 0
  %s59 = smul.u32 2, 16
  %s60 = smul.u32 %s59, 1
  %s61 = sshll.u32 %s60, 4
  %62 = dma.done [#allocation2], %s61
  %s63 = sshll.u32 %s60, 4
  %64 = dma.done %s19, %s63
  %s65 = sshll.u32 %s60, 4
  %66 = dma.done %s33, %s65
  %s67 = sshll.u32 %s60, 4
  %68 = dma.done %s47, %s67
  %69 = vsyncmov [#allocation2]
  %s70 = vpop.sfrf %69
  %p71 = scmp.eq.s32.totalorder %s70, 0
  %p72 = pneg %p71
  %74 = shalt.err (%p72)
  %s75 = scalar_lea.sflag [#allocation2], 1
  %76 = vsyncmov %s75
  %s77 = vpop.sfrf %76
  %p78 = scmp.eq.s32.totalorder %s77, 0
  %p79 = pneg %p78
  %81 = shalt.err (%p79)
  %s82 = scalar_lea.sflag [#allocation2], 2
  %83 = vsyncmov %s82
  %s84 = vpop.sfrf %83
  %p85 = scmp.eq.s32.totalorder %s84, 0
  %p86 = pneg %p85
  %88 = shalt.err (%p86)
  %s89 = scalar_lea.sflag [#allocation2], 3
  %90 = vsyncmov %s89
  %s91 = vpop.sfrf %90
  %p92 = scmp.eq.s32.totalorder %s91, 0
  %p93 = pneg %p92
  %95 = shalt.err (%p93)

</llo_original>
